<compile_context>
chip_gen: v6e
topology: v6e:2x2x1
jax: 0.10.0
libtpu: 0.0.40
codegen_flags: <defaults>
</compile_context>

<pallas_src>
import functools

import jax
import jax.numpy as jnp
from jax.experimental import pallas as pl
from jax.experimental.pallas import tpu as pltpu


def ffn_align_kernel(x_ref, w1_ref, b1_ref, w2_ref, b2_ref, w5_ref, b5_ref,
                     o_ref):
    # x_ref: (TB, C); w1: (C, H); w2/w5: (H, H); biases: (1, H); o_ref: (TB, H)

    # Feed MXU operands in the weight dtype: bf16 weights -> native bf16 MXU
    # passes with f32 accumulation; f32 weights -> these casts are no-ops.
    x = x_ref[...].astype(w1_ref.dtype)

    h = jnp.dot(x, w1_ref[...], preferred_element_type=jnp.float32)
    h = jnp.maximum(h + b1_ref[...].astype(jnp.float32), 0.0)     # fc1 + ReLU

    h = jnp.dot(h.astype(w2_ref.dtype), w2_ref[...],
                preferred_element_type=jnp.float32)
    h = jnp.maximum(h + b2_ref[...].astype(jnp.float32), 0.0)     # fc2 + ReLU

    h = jnp.dot(h.astype(w5_ref.dtype), w5_ref[...],
                preferred_element_type=jnp.float32)
    h = h + b5_ref[...].astype(jnp.float32)                       # fc5 (f32)

    # L2 normalize along feature dim (PyTorch: x / x.norm(dim=1, keepdim=True)).
    ssq = jnp.sum(h * h, axis=-1, keepdims=True)
    o_ref[...] = (h * jax.lax.rsqrt(ssq)).astype(o_ref.dtype)


def text_ffn_align_forward(x, w1, b1, w2, b2, w5, b5, *, block_b=512):
    """x: [B, C]; weights stored (in, out); returns float32 [B, 2C]."""
    B, C = x.shape
    H = w1.shape[1]  # = 2 * C

    # ---- batch tile selection ------------------------------------------------
    # Sublane-align (multiple of 8) and clamp the tile to the (aligned) batch.
    bb = max(8, min(block_b, pl.cdiv(B, 8) * 8))
    bb = pl.cdiv(bb, 8) * 8
    # Keep >= 2 grid steps when possible so the "parallel" batch axis can be
    # sharded across v7x's two TensorCores.
    if pl.cdiv(B, bb) < 2 and bb >= 16:
        bb = pl.cdiv(bb // 2, 8) * 8
    Bp = pl.cdiv(B, bb) * bb
    if Bp != B:
        x = jnp.pad(x, ((0, Bp - B), (0, 0)))

    # Biases as (1, H) 2-D rows so they map cleanly onto (sublane, lane) tiles.
    b1_2d = b1.reshape(1, H)
    b2_2d = b2.reshape(1, H)
    b5_2d = b5.reshape(1, H)

    grid = (Bp // bb,)

    x_bytes = jnp.dtype(x.dtype).itemsize
    w_bytes = jnp.dtype(w1.dtype).itemsize
    n_w_elems = C * H + 2 * H * H + 3 * H

    # ---- VMEM budget ----------------------------------------------------------
    # double-buffered input/output tiles + (double-buffered) resident weights +
    # live f32 intermediates. Only raise the scoped limit when we exceed the
    # most conservative default (v5e: 16 MiB); stay well under v7x's 64 MiB.
    vmem_need = (2 * bb * C * x_bytes          # input tiles
                 + 2 * bb * H * 4              # output tiles (f32)
                 + 2 * n_w_elems * w_bytes     # weights + biases
                 + 4 * bb * H * 4)             # f32 intermediates / headroom
    vmem_limit = None
    if vmem_need > (14 << 20):
        vmem_limit = int(min(vmem_need * 5 // 4, 60 << 20))

    flops = 2 * Bp * (C * H + 2 * H * H)
    bytes_accessed = Bp * C * x_bytes + n_w_elems * w_bytes + Bp * H * 4

    out = pl.pallas_call(
        ffn_align_kernel,
        out_shape=jax.ShapeDtypeStruct((Bp, H), jnp.float32),
        grid_spec=pltpu.PrefetchScalarGridSpec(
            num_scalar_prefetch=0,
            grid=grid,
            in_specs=[
                # Activations: tiled over batch.
                pl.BlockSpec((bb, C), lambda i: (i, 0)),
                # Weights / biases: constant block index -> DMA'd once, stay
                # VMEM-resident across all grid steps.
                pl.BlockSpec((C, H), lambda i: (0, 0)),
                pl.BlockSpec((1, H), lambda i: (0, 0)),
                pl.BlockSpec((H, H), lambda i: (0, 0)),
                pl.BlockSpec((1, H), lambda i: (0, 0)),
                pl.BlockSpec((H, H), lambda i: (0, 0)),
                pl.BlockSpec((1, H), lambda i: (0, 0)),
            ],
            out_specs=pl.BlockSpec((bb, H), lambda i: (i, 0)),
        ),
        compiler_params=pltpu.CompilerParams(
            dimension_semantics=("parallel",),
            vmem_limit_bytes=vmem_limit),
        cost_estimate=pl.CostEstimate(
            flops=flops, transcendentals=Bp, bytes_accessed=bytes_accessed),
    )(x, w1, b1_2d, w2, b2_2d, w5, b5_2d)

    return out[:B]


def reference_forward(x, w1, b1, w2, b2, w5, b5):
    f32 = jnp.float32
    h = jnp.maximum(x.astype(f32) @ w1.astype(f32) + b1.astype(f32), 0.0)
    h = jnp.maximum(h @ w2.astype(f32) + b2.astype(f32), 0.0)
    h = (h @ w5.astype(f32) + b5.astype(f32)).astype(f32)
    return h / jnp.linalg.norm(h, axis=1, keepdims=True)


if __name__ == "__main__":
    key = jax.random.PRNGKey(0)
    k_x, k_w1, k_w2, k_w5 = jax.random.split(key, 4)

    batch = 16
    num_channels = 128          # C
    hidden = 2 * num_channels   # 2C = 256
    dtype = jnp.float32

    x = jax.random.normal(k_x, (batch, num_channels), dtype=dtype)

    # Kaiming-normal-style init (std = sqrt(2 / fan_out)), biases zero — matches
    # weights_init_kaiming for Linear layers. Weights stored as (in, out).
    w1 = jax.random.normal(k_w1, (num_channels, hidden), dtype=dtype) * jnp.sqrt(
        2.0 / hidden)
    b1 = jnp.zeros((hidden,), dtype=dtype)
    w2 = jax.random.normal(k_w2, (hidden, hidden), dtype=dtype) * jnp.sqrt(
        2.0 / hidden)
    b2 = jnp.zeros((hidden,), dtype=dtype)
    w5 = jax.random.normal(k_w5, (hidden, hidden), dtype=dtype) * jnp.sqrt(
        2.0 / hidden)
    b5 = jnp.zeros((hidden,), dtype=dtype)

    fwd = jax.jit(functools.partial(text_ffn_align_forward, block_b=512))
    out = fwd(x, w1, b1, w2, b2, w5, b5)
    out = jax.block_until_ready(out)

    expected = reference_forward(x, w1, b1, w2, b2, w5, b5)

    assert out.shape == (batch, hidden), out.shape
    assert out.dtype == jnp.float32, out.dtype
    assert jnp.allclose(out, expected, atol=1e-5, rtol=1e-5), (
        "mismatch vs reference: max abs err = "
        f"{float(jnp.max(jnp.abs(out - expected)))}")

    print("KERNEL_OK")
</pallas_src>

<mosaic_0001>
module attributes {stable_mosaic.version = 11 : i64} {
  func.func @ffn_align_kernel(%arg0: i32, %arg1: memref<8x128xf32, #tpu.memory_space<vmem>>, %arg2: memref<128x256xf32, #tpu.memory_space<vmem>>, %arg3: memref<1x256xf32, #tpu.memory_space<vmem>>, %arg4: memref<256x256xf32, #tpu.memory_space<vmem>>, %arg5: memref<1x256xf32, #tpu.memory_space<vmem>>, %arg6: memref<256x256xf32, #tpu.memory_space<vmem>>, %arg7: memref<1x256xf32, #tpu.memory_space<vmem>>, %arg8: memref<8x256xf32, #tpu.memory_space<vmem>>) attributes {dimension_semantics = [#tpu.dimension_semantics<parallel>], iteration_bounds = array<i64: 2>, scalar_prefetch = 0 : i64, scratch_operands = 0 : i64, tpu.core_type = #tpu.core_type<tc>, window_params = [{transform_indices = @transform_0, window_bounds = array<i64: 8, 128>}, {pipeline_mode = #tpu.pipeline_mode<synchronous>, transform_indices = @transform_1, window_bounds = array<i64: 128, 256>}, {pipeline_mode = #tpu.pipeline_mode<synchronous>, transform_indices = @transform_2, window_bounds = array<i64: 1, 256>}, {pipeline_mode = #tpu.pipeline_mode<synchronous>, transform_indices = @transform_3, window_bounds = array<i64: 256, 256>}, {pipeline_mode = #tpu.pipeline_mode<synchronous>, transform_indices = @transform_4, window_bounds = array<i64: 1, 256>}, {pipeline_mode = #tpu.pipeline_mode<synchronous>, transform_indices = @transform_5, window_bounds = array<i64: 256, 256>}, {pipeline_mode = #tpu.pipeline_mode<synchronous>, transform_indices = @transform_6, window_bounds = array<i64: 1, 256>}, {transform_indices = @transform_7, window_bounds = array<i64: 8, 256>}]} {
    %c0 = arith.constant 0 : index
    %c0_0 = arith.constant 0 : index
    %0 = vector.load %arg1[%c0, %c0_0] : memref<8x128xf32, #tpu.memory_space<vmem>>, vector<8x128xf32>
    %c0_1 = arith.constant 0 : index
    %c0_2 = arith.constant 0 : index
    %1 = vector.load %arg2[%c0_1, %c0_2] : memref<128x256xf32, #tpu.memory_space<vmem>>, vector<128x256xf32>
    %cst = arith.constant dense<0.000000e+00> : vector<8x256xf32>
    %2 = tpu.matmul %0, %1, %cst {dimension_numbers = #tpu.dot_dimension_numbers<[1], [0], [0], [1], [0, 0, 1, 1], [], []>} : vector<8x128xf32>, vector<128x256xf32>, vector<8x256xf32> -> vector<8x256xf32>
    %c0_3 = arith.constant 0 : index
    %c0_4 = arith.constant 0 : index
    %3 = vector.load %arg3[%c0_3, %c0_4] : memref<1x256xf32, #tpu.memory_space<vmem>>, vector<1x256xf32>
    %4 = vector.broadcast %3 : vector<1x256xf32> to vector<8x256xf32>
    %5 = arith.addf %2, %4 : vector<8x256xf32>
    %cst_5 = arith.constant 0.000000e+00 : f32
    %6 = vector.broadcast %cst_5 : f32 to vector<8x256xf32>
    %7 = arith.maximumf %5, %6 : vector<8x256xf32>
    %c0_6 = arith.constant 0 : index
    %c0_7 = arith.constant 0 : index
    %8 = vector.load %arg4[%c0_6, %c0_7] : memref<256x256xf32, #tpu.memory_space<vmem>>, vector<256x256xf32>
    %cst_8 = arith.constant dense<0.000000e+00> : vector<8x256xf32>
    %9 = tpu.matmul %7, %8, %cst_8 {dimension_numbers = #tpu.dot_dimension_numbers<[1], [0], [0], [1], [0, 0, 1, 1], [], []>} : vector<8x256xf32>, vector<256x256xf32>, vector<8x256xf32> -> vector<8x256xf32>
    %c0_9 = arith.constant 0 : index
    %c0_10 = arith.constant 0 : index
    %10 = vector.load %arg5[%c0_9, %c0_10] : memref<1x256xf32, #tpu.memory_space<vmem>>, vector<1x256xf32>
    %11 = vector.broadcast %10 : vector<1x256xf32> to vector<8x256xf32>
    %12 = arith.addf %9, %11 : vector<8x256xf32>
    %cst_11 = arith.constant 0.000000e+00 : f32
    %13 = vector.broadcast %cst_11 : f32 to vector<8x256xf32>
    %14 = arith.maximumf %12, %13 : vector<8x256xf32>
    %c0_12 = arith.constant 0 : index
    %c0_13 = arith.constant 0 : index
    %15 = vector.load %arg6[%c0_12, %c0_13] : memref<256x256xf32, #tpu.memory_space<vmem>>, vector<256x256xf32>
    %cst_14 = arith.constant dense<0.000000e+00> : vector<8x256xf32>
    %16 = tpu.matmul %14, %15, %cst_14 {dimension_numbers = #tpu.dot_dimension_numbers<[1], [0], [0], [1], [0, 0, 1, 1], [], []>} : vector<8x256xf32>, vector<256x256xf32>, vector<8x256xf32> -> vector<8x256xf32>
    %c0_15 = arith.constant 0 : index
    %c0_16 = arith.constant 0 : index
    %17 = vector.load %arg7[%c0_15, %c0_16] : memref<1x256xf32, #tpu.memory_space<vmem>>, vector<1x256xf32>
    %18 = vector.broadcast %17 : vector<1x256xf32> to vector<8x256xf32>
    %19 = arith.addf %16, %18 : vector<8x256xf32>
    %20 = arith.mulf %19, %19 : vector<8x256xf32>
    %cst_17 = arith.constant dense<0.000000e+00> : vector<8xf32>
    %21 = vector.multi_reduction <add>, %20, %cst_17 [1] : vector<8x256xf32> to vector<8xf32>
    %22 = vector.shape_cast %21 : vector<8xf32> to vector<8x1xf32>
    %23 = math.rsqrt %22 : vector<8x1xf32>
    %24 = vector.broadcast %23 : vector<8x1xf32> to vector<8x256xf32>
    %25 = arith.mulf %19, %24 : vector<8x256xf32>
    %c0_18 = arith.constant 0 : index
    %c0_19 = arith.constant 0 : index
    %26 = vector.load %arg8[%c0_18, %c0_19] : memref<8x256xf32, #tpu.memory_space<vmem>>, vector<8x256xf32>
    tpu.vector_store %arg8[%c0_18, %c0_19], %25 {strides = array<i32>} : memref<8x256xf32, #tpu.memory_space<vmem>>, vector<8x256xf32>,
    return
  }
  func.func @transform_0(%arg0: i32) -> (i32, i32) {
    %c0_i32 = arith.constant 0 : i32
    %c0_i32_0 = arith.constant 0 : i32
    return %arg0, %c0_i32 : i32, i32
  }
  func.func @transform_1(%arg0: i32) -> (i32, i32) {
    %c0_i32 = arith.constant 0 : i32
    %c0_i32_0 = arith.constant 0 : i32
    %c0_i32_1 = arith.constant 0 : i32
    return %c0_i32, %c0_i32_0 : i32, i32
  }
  func.func @transform_2(%arg0: i32) -> (i32, i32) {
    %c0_i32 = arith.constant 0 : i32
    %c0_i32_0 = arith.constant 0 : i32
    %c0_i32_1 = arith.constant 0 : i32
    return %c0_i32, %c0_i32_0 : i32, i32
  }
  func.func @transform_3(%arg0: i32) -> (i32, i32) {
    %c0_i32 = arith.constant 0 : i32
    %c0_i32_0 = arith.constant 0 : i32
    %c0_i32_1 = arith.constant 0 : i32
    return %c0_i32, %c0_i32_0 : i32, i32
  }
  func.func @transform_4(%arg0: i32) -> (i32, i32) {
    %c0_i32 = arith.constant 0 : i32
    %c0_i32_0 = arith.constant 0 : i32
    %c0_i32_1 = arith.constant 0 : i32
    return %c0_i32, %c0_i32_0 : i32, i32
  }
  func.func @transform_5(%arg0: i32) -> (i32, i32) {
    %c0_i32 = arith.constant 0 : i32
    %c0_i32_0 = arith.constant 0 : i32
    %c0_i32_1 = arith.constant 0 : i32
    return %c0_i32, %c0_i32_0 : i32, i32
  }
  func.func @transform_6(%arg0: i32) -> (i32, i32) {
    %c0_i32 = arith.constant 0 : i32
    %c0_i32_0 = arith.constant 0 : i32
    %c0_i32_1 = arith.constant 0 : i32
    return %c0_i32, %c0_i32_0 : i32, i32
  }
  func.func @transform_7(%arg0: i32) -> (i32, i32) {
    %c0_i32 = arith.constant 0 : i32
    %c0_i32_0 = arith.constant 0 : i32
    return %arg0, %c0_i32 : i32, i32
  }
}

</mosaic_0001>

<llo_original>
// kernel: text_ffn_align_forward.1
$region0: #{text_ffn_align_forward.1}
  #allocation0 [shape = 'u32[]', space=smem, size = 0x4, offset = 0x4, fixed_abs, tag = 'smem constant byte address 0x4 - core index']
  #allocation1 [shape = 'u32[144,128]{1,0:T(1,128)}', space=vmem, size = 0x12000, scoped, tag = 'internal scratch']
  %s0 = inlined_call_operand.hbm [shape: f32[16,128], index: 0, kind: input, shape index: {}]
  %s1 = inlined_call_operand.hbm [shape: f32[128,256], index: 1, kind: input, shape index: {}]
  %s2 = inlined_call_operand.vmem [shape: f32[1,256], index: 2, kind: input, shape index: {}]
  %s3 = inlined_call_operand.hbm [shape: f32[256,256], index: 3, kind: input, shape index: {}]
  %s4 = inlined_call_operand.vmem [shape: f32[1,256], index: 4, kind: input, shape index: {}]
  %s5 = inlined_call_operand.hbm [shape: f32[256,256], index: 5, kind: input, shape index: {}]
  %s6 = inlined_call_operand.vmem [shape: f32[1,256], index: 6, kind: input, shape index: {}]
  %s7 = inlined_call_operand.hbm [shape: f32[16,256], index: 7, kind: output, shape index: {}]
  %s8 = sld [smem:[#allocation0]]
  $region77: #{text_ffn_align_forward.1} parent=0
    _
  %s10 = ssub.s32 1, %s8
  %s11 = scalar_select 0, %s10, %s8
  $region1: #{text_ffn_align_forward.1} parent=0
    #allocation2 [shape = 'u8[8192]{0}', space=vmem, size = 0x2000, scoped, tag = 'input window, operand 0']
    #allocation3 [shape = 's32[2]{0}', space=sflag, size = 0x8, scoped, tag = 'scoped memory for text_ffn_align_forward.1']
    #allocation4 [shape = 's32[2]{0}', space=sflag, size = 0x8, scoped, tag = 'scoped memory for text_ffn_align_forward.1']
    #allocation5 [shape = 'u8[131072]{0}', space=vmem, size = 0x20000, scoped, tag = 'input window, operand 1, single buffered']
    #allocation6 [shape = 's32[1]{0}', space=sflag, size = 0x4, scoped, tag = 'scoped memory for text_ffn_align_forward.1']
    #allocation7 [shape = 'u8[262144]{0}', space=vmem, size = 0x40000, scoped, tag = 'input window, operand 3, single buffered']
    #allocation8 [shape = 'u8[262144]{0}', space=vmem, size = 0x40000, scoped, tag = 'input window, operand 5, single buffered']
    #allocation9 [shape = 's32[1]{0}', space=sflag, size = 0x4, scoped, tag = 'scoped memory for text_ffn_align_forward.1']
    #allocation10 [shape = 'u8[16384]{0}', space=vmem, size = 0x4000, scoped, tag = 'output window, operand 0']
    %12 = vsyncpa [#allocation3], 0
    %s13 = scalar_lea.sflag [#allocation3], 1
    %14 = vsyncpa %s13, 0
    %15 = vsyncpa [#allocation6], 0
    %16 = vsyncpa [#allocation9], 0
    %17 = vsyncpa [#allocation4], 0
    %s18 = scalar_lea.sflag [#allocation4], 1
    %19 = vsyncpa %s18, 0
    loop: start=0, step=1, limit=4
    $region2: #{text_ffn_align_forward.1} parent=1 // loop_pre_header
      _
    $region3: #{text_ffn_align_forward.1} parent=1 // loop_header
      %s21 = sphi 0, %s25
      %p22 = scmp.ge.s32.totalorder %s21, 4
      %s31 = sphi 0, %s33
      %s34 = sphi 0, %s31
      %s35 = sphi 0, %s34
      %s51 = sphi 0, %s35
      %s55 = sphi 0, %s55
      %s57 = sphi 0, %s55
      %s58 = sphi 0, %s57
      %s72 = sphi 0, %s58
      %s76 = sphi 0, %s76
      %s78 = sphi 0, %s76
      %s79 = sphi 0, %s78
      %s93 = sphi 0, %s79
      %s97 = sphi 0, %s97
      %s99 = sphi 0, %s97
      %s100 = sphi 0, %s99
      %s114 = sphi 0, %s100
      %s118 = sphi 0, %s118
      %s120 = sphi 0, %s118
      %s121 = sphi 0, %s120
      %s135 = sphi 0, %s121
      %s139 = sphi 0, %s139
      %s141 = sphi 0, %s139
      %s142 = sphi 0, %s141
      %s156 = sphi 0, %s142
      %s160 = sphi 0, %s160
      %s162 = sphi 0, %s160
      %s163 = sphi 0, %s162
      %s177 = sphi 0, %s163
      %s183 = sphi 0, %s185
      %s186 = sphi 0, %s183
      %s187 = sphi 0, %s186
      %s203 = sphi 0, %s187
    $region4: #{text_ffn_align_forward.1} parent=1 // loop_header_branch
      %24 = sbr.rel (%p22) target = $region8
    $region5: #{text_ffn_align_forward.1} parent=1 // loop_body
      %s26 = ssub.s32 %s21, 1
      %s27 = ssub.s32 %s21, 2
      %s28 = sadd.s32 %s21, 1
      %s29 = ssub.s32 %s21, %s28
      %p30 = scmp.eq.s32.totalorder %s29, 0
      %s32 = sadd.s32 %s31, 1
      %s33 = scalar_select %p30, %s31, %s32
      %p36 = pneg %p30
      %p37 = scmp.eq.s32.totalorder %s21, 1
      %p38 = por %p36, %p37
      %p39 = scmp.ne.s32.totalorder %s31, %s34
      %p40 = scmp.eq.s32.totalorder %s21, 0
      %p41 = por %p39, %p40
      %p42 = scmp.ne.s32.totalorder %s31, %s34
      %p43 = scmp.eq.s32.totalorder %s26, 1
      %p44 = por %p42, %p43
      %p45 = scmp.ne.s32.totalorder %s34, %s35
      %p46 = scmp.eq.s32.totalorder %s26, 0
      %p47 = por %p45, %p46
      %p48 = scmp.ne.s32.totalorder %s34, %s35
      %p49 = scmp.eq.s32.totalorder %s27, 1
      %p50 = por %p48, %p49
      %p52 = scmp.ne.s32.totalorder %s35, %s51
      %p53 = scmp.eq.s32.totalorder %s27, 0
      %p54 = por %p52, %p53
      %s56 = sadd.s32 %s55, 1
      %p59 = scmp.eq.s32.totalorder %s21, 1
      %p60 = scmp.ne.s32.totalorder %s55, %s57
      %p61 = scmp.eq.s32.totalorder %s21, 0
      %p62 = por %p60, %p61
      %p63 = scmp.ne.s32.totalorder %s55, %s57
      %p64 = scmp.eq.s32.totalorder %s26, 1
      %p65 = por %p63, %p64
      %p66 = scmp.ne.s32.totalorder %s57, %s58
      %p67 = scmp.eq.s32.totalorder %s26, 0
      %p68 = por %p66, %p67
      %p69 = scmp.ne.s32.totalorder %s57, %s58
      %p70 = scmp.eq.s32.totalorder %s27, 1
      %p71 = por %p69, %p70
      %p73 = scmp.ne.s32.totalorder %s58, %s72
      %p74 = scmp.eq.s32.totalorder %s27, 0
      %p75 = por %p73, %p74
      %s77 = sadd.s32 %s76, 1
      %p80 = scmp.eq.s32.totalorder %s21, 1
      %p81 = scmp.ne.s32.totalorder %s76, %s78
      %p82 = scmp.eq.s32.totalorder %s21, 0
      %p83 = por %p81, %p82
      %p84 = scmp.ne.s32.totalorder %s76, %s78
      %p85 = scmp.eq.s32.totalorder %s26, 1
      %p86 = por %p84, %p85
      %p87 = scmp.ne.s32.totalorder %s78, %s79
      %p88 = scmp.eq.s32.totalorder %s26, 0
      %p89 = por %p87, %p88
      %p90 = scmp.ne.s32.totalorder %s78, %s79
      %p91 = scmp.eq.s32.totalorder %s27, 1
      %p92 = por %p90, %p91
      %p94 = scmp.ne.s32.totalorder %s79, %s93
      %p95 = scmp.eq.s32.totalorder %s27, 0
      %p96 = por %p94, %p95
      %s98 = sadd.s32 %s97, 1
      %p101 = scmp.eq.s32.totalorder %s21, 1
      %p102 = scmp.ne.s32.totalorder %s97, %s99
      %p103 = scmp.eq.s32.totalorder %s21, 0
      %p104 = por %p102, %p103
      %p105 = scmp.ne.s32.totalorder %s97, %s99
      %p106 = scmp.eq.s32.totalorder %s26, 1
      %p107 = por %p105, %p106
      %p108 = scmp.ne.s32.totalorder %s99, %s100
      %p109 = scmp.eq.s32.totalorder %s26, 0
      %p110 = por %p108, %p109
      %p111 = scmp.ne.s32.totalorder %s99, %s100
      %p112 = scmp.eq.s32.totalorder %s27, 1
      %p113 = por %p111, %p112
      %p115 = scmp.ne.s32.totalorder %s100, %s114
      %p116 = scmp.eq.s32.totalorder %s27, 0
      %p117 = por %p115, %p116
      %s119 = sadd.s32 %s118, 1
      %p122 = scmp.eq.s32.totalorder %s21, 1
      %p123 = scmp.ne.s32.totalorder %s118, %s120
      %p124 = scmp.eq.s32.totalorder %s21, 0
      %p125 = por %p123, %p124
      %p126 = scmp.ne.s32.totalorder %s118, %s120
      %p127 = scmp.eq.s32.totalorder %s26, 1
      %p128 = por %p126, %p127
      %p129 = scmp.ne.s32.totalorder %s120, %s121
      %p130 = scmp.eq.s32.totalorder %s26, 0
      %p131 = por %p129, %p130
      %p132 = scmp.ne.s32.totalorder %s120, %s121
      %p133 = scmp.eq.s32.totalorder %s27, 1
      %p134 = por %p132, %p133
      %p136 = scmp.ne.s32.totalorder %s121, %s135
      %p137 = scmp.eq.s32.totalorder %s27, 0
      %p138 = por %p136, %p137
      %s140 = sadd.s32 %s139, 1
      %p143 = scmp.eq.s32.totalorder %s21, 1
      %p144 = scmp.ne.s32.totalorder %s139, %s141
      %p145 = scmp.eq.s32.totalorder %s21, 0
      %p146 = por %p144, %p145
      %p147 = scmp.ne.s32.totalorder %s139, %s141
      %p148 = scmp.eq.s32.totalorder %s26, 1
      %p149 = por %p147, %p148
      %p150 = scmp.ne.s32.totalorder %s141, %s142
      %p151 = scmp.eq.s32.totalorder %s26, 0
      %p152 = por %p150, %p151
      %p153 = scmp.ne.s32.totalorder %s141, %s142
      %p154 = scmp.eq.s32.totalorder %s27, 1
      %p155 = por %p153, %p154
      %p157 = scmp.ne.s32.totalorder %s142, %s156
      %p158 = scmp.eq.s32.totalorder %s27, 0
      %p159 = por %p157, %p158
      %s161 = sadd.s32 %s160, 1
      %p164 = scmp.eq.s32.totalorder %s21, 1
      %p165 = scmp.ne.s32.totalorder %s160, %s162
      %p166 = scmp.eq.s32.totalorder %s21, 0
      %p167 = por %p165, %p166
      %p168 = scmp.ne.s32.totalorder %s160, %s162
      %p169 = scmp.eq.s32.totalorder %s26, 1
      %p170 = por %p168, %p169
      %p171 = scmp.ne.s32.totalorder %s162, %s163
      %p172 = scmp.eq.s32.totalorder %s26, 0
      %p173 = por %p171, %p172
      %p174 = scmp.ne.s32.totalorder %s162, %s163
      %p175 = scmp.eq.s32.totalorder %s27, 1
      %p176 = por %p174, %p175
      %p178 = scmp.ne.s32.totalorder %s163, %s177
      %p179 = scmp.eq.s32.totalorder %s27, 0
      %p180 = por %p178, %p179
      %s181 = ssub.s32 %s21, %s28
      %p182 = scmp.eq.s32.totalorder %s181, 0
      %s184 = sadd.s32 %s183, 1
      %s185 = scalar_select %p182, %s183, %s184
      %p188 = pneg %p182
      %p189 = scmp.eq.s32.totalorder %s21, 1
      %p190 = por %p188, %p189
      %p191 = scmp.ne.s32.totalorder %s183, %s186
      %p192 = scmp.eq.s32.totalorder %s21, 0
      %p193 = por %p191, %p192
      %p194 = scmp.ne.s32.totalorder %s183, %s186
      %p195 = scmp.eq.s32.totalorder %s26, 1
      %p196 = por %p194, %p195
      %p197 = scmp.ne.s32.totalorder %s186, %s187
      %p198 = scmp.eq.s32.totalorder %s26, 0
      %p199 = por %p197, %p198
      %p200 = scmp.ne.s32.totalorder %s186, %s187
      %p201 = scmp.eq.s32.totalorder %s27, 1
      %p202 = por %p200, %p201
      %p204 = scmp.ne.s32.totalorder %s187, %s203
      %p205 = scmp.eq.s32.totalorder %s27, 0
      %p206 = por %p204, %p205
      %p207 = scmp.le.s32.totalorder 1, %s21
      %p208 = scmp.lt.s32.totalorder %s21, 3
      %p209 = pnand %p207, %p208
      %p210 = pneg %p209
      // Predicated region
      $region9: #{text_ffn_align_forward.1} parent=5 // pred_check
        _
      $region10: #{text_ffn_align_forward.1} parent=5 // pred_check_branch
        %212 = sbr.rel (%p209) target = $region12
      $region11: #{text_ffn_align_forward.1} parent=5 // pred_region
        %s213 = ssub.s32 %s21, 1
        // Predicated region
        $region13: #{text_ffn_align_forward.1} parent=11 // pred_check
          %p214 = pneg %p68
        $region14: #{text_ffn_align_forward.1} parent=11 // pred_check_branch
          %216 = sbr.rel (%p214) target = $region16
        $region15: #{text_ffn_align_forward.1} parent=11 // pred_region
          %s218 = ssub.s32 4096, 4096
          %219 = vsyncadd [#allocation6], %s218
          %s220 = sshll.u32 [#allocation5], 4
          %s221 = int_to_ptr.vmem [resolvable:$true] %s220
          %226 = dma.hbm_to_vmem [thread:$0]  %s1, 4096, %s221, [#allocation6], 256, 256, 16
        $region16: #{text_ffn_align_forward.1} parent=11 // pred_fallthru
          _
        // Predicated region
        $region17: #{text_ffn_align_forward.1} parent=11 // pred_check
          %p227 = pneg %p89
        $region18: #{text_ffn_align_forward.1} parent=11 // pred_check_branch
          %229 = sbr.rel (%p227) target = $region20
        $region19: #{text_ffn_align_forward.1} parent=11 // pred_region
          _
        $region20: #{text_ffn_align_forward.1} parent=11 // pred_fallthru
          _
        // Predicated region
        $region21: #{text_ffn_align_forward.1} parent=11 // pred_check
          %p230 = pneg %p110
        $region22: #{text_ffn_align_forward.1} parent=11 // pred_check_branch
          %232 = sbr.rel (%p230) target = $region24
        $region23: #{text_ffn_align_forward.1} parent=11 // pred_region
          %s234 = ssub.s32 8192, 8192
          %235 = vsyncadd [#allocation6], %s234
          %s236 = sshll.u32 [#allocation7], 4
          %s237 = int_to_ptr.vmem [resolvable:$true] %s236
          %242 = dma.hbm_to_vmem [thread:$0]  %s3, 8192, %s237, [#allocation6], 256, 256, 16
        $region24: #{text_ffn_align_forward.1} parent=11 // pred_fallthru
          _
        // Predicated region
        $region25: #{text_ffn_align_forward.1} parent=11 // pred_check
          %p243 = pneg %p131
        $region26: #{text_ffn_align_forward.1} parent=11 // pred_check_branch
          %245 = sbr.rel (%p243) target = $region28
        $region27: #{text_ffn_align_forward.1} parent=11 // pred_region
          _
        $region28: #{text_ffn_align_forward.1} parent=11 // pred_fallthru
          _
        // Predicated region
        $region29: #{text_ffn_align_forward.1} parent=11 // pred_check
          %p246 = pneg %p152
        $region30: #{text_ffn_align_forward.1} parent=11 // pred_check_branch
          %248 = sbr.rel (%p246) target = $region32
        $region31: #{text_ffn_align_forward.1} parent=11 // pred_region
          %s250 = ssub.s32 8192, 8192
          %251 = vsyncadd [#allocation9], %s250
          %s252 = sshll.u32 [#allocation8], 4
          %s253 = int_to_ptr.vmem [resolvable:$true] %s252
          %258 = dma.hbm_to_vmem [thread:$0]  %s5, 8192, %s253, [#allocation9], 256, 256, 16
        $region32: #{text_ffn_align_forward.1} parent=11 // pred_fallthru
          _
        // Predicated region
        $region33: #{text_ffn_align_forward.1} parent=11 // pred_check
          %p259 = pneg %p173
        $region34: #{text_ffn_align_forward.1} parent=11 // pred_check_branch
          %261 = sbr.rel (%p259) target = $region36
        $region35: #{text_ffn_align_forward.1} parent=11 // pred_region
          _
        $region36: #{text_ffn_align_forward.1} parent=11 // pred_fallthru
          _
      $region12: #{text_ffn_align_forward.1} parent=5 // pred_fallthru
        _
      %p262 = scmp.lt.s32.totalorder %s21, 2
      // Predicated region
      $region37: #{text_ffn_align_forward.1} parent=5 // pred_check
        %p263 = pneg %p262
      $region38: #{text_ffn_align_forward.1} parent=5 // pred_check_branch
        %265 = sbr.rel (%p263) target = $region40
      $region39: #{text_ffn_align_forward.1} parent=5 // pred_region
        // Predicated region
        $region41: #{text_ffn_align_forward.1} parent=39 // pred_check
          %p266 = pneg %p41
        $region42: #{text_ffn_align_forward.1} parent=39 // pred_check_branch
          %268 = sbr.rel (%p266) target = $region44
        $region43: #{text_ffn_align_forward.1} parent=39 // pred_region
          %s269 = sand.u32 %s31, 1
          %s270 = scalar_lea.sflag [#allocation3], %s269
          %s271 = sand.u32 %s31, 1
          %s272 = smul.addr %s271, 8
          %s273 = scalar_lea.vmem [#allocation2], %s272
          %s275 = ssub.s32 128, 128
          %276 = vsyncadd %s270, %s275
          %s277 = smul.addr %s21, 128
          %s278 = scalar_lea.hbm %s0, %s277
          %s280 = sshll.u32 %s273, 4
          %s281 = int_to_ptr.vmem [resolvable:$true] %s280
          %283 = dma.hbm_to_vmem [thread:$0]  %s278, 128, %s281, %s270
        $region44: #{text_ffn_align_forward.1} parent=39 // pred_fallthru
          _
      $region40: #{text_ffn_align_forward.1} parent=5 // pred_fallthru
        _
      %p284 = scmp.le.s32.totalorder 1, %s21
      %p285 = scmp.lt.s32.totalorder %s21, 3
      %p286 = pnand %p284, %p285
      %p287 = pneg %p286
      // Predicated region
      $region45: #{text_ffn_align_forward.1} parent=5 // pred_check
        _
      $region46: #{text_ffn_align_forward.1} parent=5 // pred_check_branch
        %289 = sbr.rel (%p286) target = $region48
      $region47: #{text_ffn_align_forward.1} parent=5 // pred_region
        %s290 = ssub.s32 %s21, 1
        %s291 = sand.u32 %s34, 1
        %s292 = scalar_lea.sflag [#allocation3], %s291
        %s293 = sand.u32 %s34, 1
        %s294 = smul.addr %s293, 8
        %s295 = scalar_lea.vmem [#allocation2], %s294
        // Predicated region
        $region49: #{text_ffn_align_forward.1} parent=47 // pred_check
          %p296 = pneg %p47
        $region50: #{text_ffn_align_forward.1} parent=47 // pred_check_branch
          %298 = sbr.rel (%p296) target = $region52
        $region51: #{text_ffn_align_forward.1} parent=47 // pred_region
          %299 = dma.done %s292, 128
        $region52: #{text_ffn_align_forward.1} parent=47 // pred_fallthru
          _
        // Predicated region
        $region53: #{text_ffn_align_forward.1} parent=47 // pred_check
          %p300 = pneg %p68
        $region54: #{text_ffn_align_forward.1} parent=47 // pred_check_branch
          %302 = sbr.rel (%p300) target = $region56
        $region55: #{text_ffn_align_forward.1} parent=47 // pred_region
          %303 = dma.done [#allocation6], 4096
        $region56: #{text_ffn_align_forward.1} parent=47 // pred_fallthru
          _
        // Predicated region
        $region57: #{text_ffn_align_forward.1} parent=47 // pred_check
          %p304 = pneg %p110
        $region58: #{text_ffn_align_forward.1} parent=47 // pred_check_branch
          %306 = sbr.rel (%p304) target = $region60
        $region59: #{text_ffn_align_forward.1} parent=47 // pred_region
          %307 = dma.done [#allocation6], 8192
        $region60: #{text_ffn_align_forward.1} parent=47 // pred_fallthru
          _
        // Predicated region
        $region61: #{text_ffn_align_forward.1} parent=47 // pred_check
          %p308 = pneg %p152
        $region62: #{text_ffn_align_forward.1} parent=47 // pred_check_branch
          %310 = sbr.rel (%p308) target = $region64
        $region63: #{text_ffn_align_forward.1} parent=47 // pred_region
          %311 = dma.done [#allocation9], 8192
        $region64: #{text_ffn_align_forward.1} parent=47 // pred_fallthru
          _
        %s312 = sand.u32 %s34, 1
        %s313 = scalar_lea.sflag [#allocation3], %s312
        %s314 = sand.u32 %s34, 1
        %s315 = smul.addr %s314, 8
        %s316 = scalar_lea.vmem [#allocation2], %s315
        %p317 = pneg %p47
        %p318 = pneg %p44
        %p319 = pneg %p68
        %p320 = pneg %p65
        %p321 = pneg %p89
        %p322 = pneg %p86
        %p323 = pneg %p110
        %p324 = pneg %p107
        %p325 = pneg %p131
        %p326 = pneg %p128
        %p327 = pneg %p152
        %p328 = pneg %p149
        %p329 = pneg %p173
        %p330 = pneg %p170
        %p331 = pneg %p199
        %p332 = pneg %p196
        %s333 = sand.u32 %s186, 1
        %s334 = scalar_lea.sflag [#allocation4], %s333
        %s335 = sand.u32 %s186, 1
        %s336 = smul.addr %s335, 16
        %s337 = scalar_lea.vmem [#allocation10], %s336
        %v338 = vld [vmem:[%s295] sm:$0xff]
        %v339 = vld [vmem:[#allocation5] sm:$0xff]
        %v340 = vld [vmem:[#allocation5 + $0x8] sm:$0xff]
        %v341 = vld [vmem:[#allocation5 + $0x10] sm:$0xff]
        %v342 = vld [vmem:[#allocation5 + $0x18] sm:$0xff]
        %v343 = vld [vmem:[#allocation5 + $0x20] sm:$0xff]
        %v344 = vld [vmem:[#allocation5 + $0x28] sm:$0xff]
        %v345 = vld [vmem:[#allocation5 + $0x30] sm:$0xff]
        %v346 = vld [vmem:[#allocation5 + $0x38] sm:$0xff]
        %v347 = vld [vmem:[#allocation5 + $0x40] sm:$0xff]
        %v348 = vld [vmem:[#allocation5 + $0x48] sm:$0xff]
        %v349 = vld [vmem:[#allocation5 + $0x50] sm:$0xff]
        %v350 = vld [vmem:[#allocation5 + $0x58] sm:$0xff]
        %v351 = vld [vmem:[#allocation5 + $0x60] sm:$0xff]
        %v352 = vld [vmem:[#allocation5 + $0x68] sm:$0xff]
        %v353 = vld [vmem:[#allocation5 + $0x70] sm:$0xff]
        %v354 = vld [vmem:[#allocation5 + $0x78] sm:$0xff]
        %v355 = vld [vmem:[#allocation5 + $0x80] sm:$0xff]
        %v356 = vld [vmem:[#allocation5 + $0x88] sm:$0xff]
        %v357 = vld [vmem:[#allocation5 + $0x90] sm:$0xff]
        %v358 = vld [vmem:[#allocation5 + $0x98] sm:$0xff]
        %v359 = vld [vmem:[#allocation5 + $0xa0] sm:$0xff]
        %v360 = vld [vmem:[#allocation5 + $0xa8] sm:$0xff]
        %v361 = vld [vmem:[#allocation5 + $0xb0] sm:$0xff]
        %v362 = vld [vmem:[#allocation5 + $0xb8] sm:$0xff]
        %v363 = vld [vmem:[#allocation5 + $0xc0] sm:$0xff]
        %v364 = vld [vmem:[#allocation5 + $0xc8] sm:$0xff]
        %v365 = vld [vmem:[#allocation5 + $0xd0] sm:$0xff]
        %v366 = vld [vmem:[#allocation5 + $0xd8] sm:$0xff]
        %v367 = vld [vmem:[#allocation5 + $0xe0] sm:$0xff]
        %v368 = vld [vmem:[#allocation5 + $0xe8] sm:$0xff]
        %v369 = vld [vmem:[#allocation5 + $0xf0] sm:$0xff]
        %v370 = vld [vmem:[#allocation5 + $0xf8] sm:$0xff]
        %v371 = vld [vmem:[%s2] sm:$0x3]
        %v373 = vlaneseq
        %v374 = vshrl.u32 %v373, 7
        %v375 = vsub.s32 0, %v374
        %v376 = vrot.slane %v371, %v375
        %v377 = vlaneseq
        %v378 = vshrl.u32 %v377, 7
        %v379 = vsub.s32 1, %v378
        %v380 = vrot.slane %v371, %v379
        %383 = vmatprep.subr.mxu0 %v370
        %384 = vmatpush1.msra.mxu0 %v369
        %385 = vmatprep.subr.mxu0 %v368
        %386 = vmatpush1.msra.mxu0 %v367
        %387 = vmatprep.subr.mxu0 %v366
        %388 = vmatpush1.msra.mxu0 %v365
        %389 = vmatprep.subr.mxu0 %v364
        %390 = vmatpush1.msra.mxu0 %v363
        %391 = vmatprep.subr.mxu0 %v362
        %392 = vmatpush1.msra.mxu0 %v361
        %393 = vmatprep.subr.mxu0 %v360
        %394 = vmatpush1.msra.mxu0 %v359
        %395 = vmatprep.subr.mxu0 %v358
        %396 = vmatpush1.msra.mxu0 %v357
        %397 = vmatprep.subr.mxu0 %v356
        %398 = vmatpush1.msra.mxu0 %v355
        %399 = vmatprep.subr.mxu0 %v354
        %400 = vmatpush1.msra.mxu0 %v353
        %401 = vmatprep.subr.mxu0 %v352
        %402 = vmatpush1.msra.mxu0 %v351
        %403 = vmatprep.subr.mxu0 %v350
        %404 = vmatpush1.msra.mxu0 %v349
        %405 = vmatprep.subr.mxu0 %v348
        %406 = vmatpush1.msra.mxu0 %v347
        %407 = vmatprep.subr.mxu0 %v346
        %408 = vmatpush1.msra.mxu0 %v345
        %409 = vmatprep.subr.mxu0 %v344
        %410 = vmatpush1.msra.mxu0 %v343
        %411 = vmatprep.subr.mxu0 %v342
        %412 = vmatpush1.msra.mxu0 %v341
        %413 = vmatprep.subr.mxu0 %v340
        %414 = vmatpush1.msra.mxu0 %v339
        %415 = vmatprep.subr.mxu0 0.0
        %416 = vmatpush2.msra.mxu0 0.0
        %417 = vmatprep.subr.mxu0 0.0
        %418 = vmatpush2.msra.mxu0 0.0
        %419 = vmatprep.subr.mxu0 0.0
        %420 = vmatpush2.msra.mxu0 0.0
        %421 = vmatprep.subr.mxu0 0.0
        %422 = vmatpush2.msra.mxu0 0.0
        %423 = vmatprep.subr.mxu0 0.0
        %424 = vmatpush2.msra.mxu0 0.0
        %425 = vmatprep.subr.mxu0 0.0
        %426 = vmatpush2.msra.mxu0 0.0
        %427 = vmatprep.subr.mxu0 0.0
        %428 = vmatpush2.msra.mxu0 0.0
        %429 = vmatprep.subr.mxu0 0.0
        %430 = vmatpush2.msra.mxu0 0.0
        %431 = vmatprep.subr.mxu0 0.0
        %432 = vmatpush2.msra.mxu0 0.0
        %433 = vmatprep.subr.mxu0 0.0
        %434 = vmatpush2.msra.mxu0 0.0
        %435 = vmatprep.subr.mxu0 0.0
        %436 = vmatpush2.msra.mxu0 0.0
        %437 = vmatprep.subr.mxu0 0.0
        %438 = vmatpush2.msra.mxu0 0.0
        %439 = vmatprep.subr.mxu0 0.0
        %440 = vmatpush2.msra.mxu0 0.0
        %441 = vmatprep.subr.mxu0 0.0
        %442 = vmatpush2.msra.mxu0 0.0
        %443 = vmatprep.subr.mxu0 0.0
        %444 = vmatpush2.msra.mxu0 0.0
        %445 = vmatprep.subr.mxu0 0.0
        %446 = vmatpush2.msra.mxu0 0.0
        %447 = vmatprep.mubr.f32.mxu0 0.0
        %448 = vmatmul.mubr.f32.gmra.mxu0 %v338
        %v449 = vpop.f32.mrf.mxu0
        %v450 = vadd.f32 %v376, %v449
        %v451 = vpop.f32.mrf.mxu0
        %v452 = vadd.f32 %v380, %v451
        %453 = vdwg.mxu0
        %v454 = vmax.f32 %v450, 0.0
        %v455 = vmax.f32 %v452, 0.0
        %v456 = vld [vmem:[#allocation7] sm:$0xff]
        %v457 = vld [vmem:[#allocation7 + $0x8] sm:$0xff]
        %v458 = vld [vmem:[#allocation7 + $0x10] sm:$0xff]
        %v459 = vld [vmem:[#allocation7 + $0x18] sm:$0xff]
        %v460 = vld [vmem:[#allocation7 + $0x20] sm:$0xff]
        %v461 = vld [vmem:[#allocation7 + $0x28] sm:$0xff]
        %v462 = vld [vmem:[#allocation7 + $0x30] sm:$0xff]
        %v463 = vld [vmem:[#allocation7 + $0x38] sm:$0xff]
        %v464 = vld [vmem:[#allocation7 + $0x40] sm:$0xff]
        %v465 = vld [vmem:[#allocation7 + $0x48] sm:$0xff]
        %v466 = vld [vmem:[#allocation7 + $0x50] sm:$0xff]
        %v467 = vld [vmem:[#allocation7 + $0x58] sm:$0xff]
        %v468 = vld [vmem:[#allocation7 + $0x60] sm:$0xff]
        %v469 = vld [vmem:[#allocation7 + $0x68] sm:$0xff]
        %v470 = vld [vmem:[#allocation7 + $0x70] sm:$0xff]
        %v471 = vld [vmem:[#allocation7 + $0x78] sm:$0xff]
        %v472 = vld [vmem:[#allocation7 + $0x80] sm:$0xff]
        %v473 = vld [vmem:[#allocation7 + $0x88] sm:$0xff]
        %v474 = vld [vmem:[#allocation7 + $0x90] sm:$0xff]
        %v475 = vld [vmem:[#allocation7 + $0x98] sm:$0xff]
        %v476 = vld [vmem:[#allocation7 + $0xa0] sm:$0xff]
        %v477 = vld [vmem:[#allocation7 + $0xa8] sm:$0xff]
        %v478 = vld [vmem:[#allocation7 + $0xb0] sm:$0xff]
        %v479 = vld [vmem:[#allocation7 + $0xb8] sm:$0xff]
        %v480 = vld [vmem:[#allocation7 + $0xc0] sm:$0xff]
        %v481 = vld [vmem:[#allocation7 + $0xc8] sm:$0xff]
        %v482 = vld [vmem:[#allocation7 + $0xd0] sm:$0xff]
        %v483 = vld [vmem:[#allocation7 + $0xd8] sm:$0xff]
        %v484 = vld [vmem:[#allocation7 + $0xe0] sm:$0xff]
        %v485 = vld [vmem:[#allocation7 + $0xe8] sm:$0xff]
        %v486 = vld [vmem:[#allocation7 + $0xf0] sm:$0xff]
        %v487 = vld [vmem:[#allocation7 + $0xf8] sm:$0xff]
        %v488 = vld [vmem:[#allocation7 + $0x100] sm:$0xff]
        %v489 = vld [vmem:[#allocation7 + $0x108] sm:$0xff]
        %v490 = vld [vmem:[#allocation7 + $0x110] sm:$0xff]
        %v491 = vld [vmem:[#allocation7 + $0x118] sm:$0xff]
        %v492 = vld [vmem:[#allocation7 + $0x120] sm:$0xff]
        %v493 = vld [vmem:[#allocation7 + $0x128] sm:$0xff]
        %v494 = vld [vmem:[#allocation7 + $0x130] sm:$0xff]
        %v495 = vld [vmem:[#allocation7 + $0x138] sm:$0xff]
        %v496 = vld [vmem:[#allocation7 + $0x140] sm:$0xff]
        %v497 = vld [vmem:[#allocation7 + $0x148] sm:$0xff]
        %v498 = vld [vmem:[#allocation7 + $0x150] sm:$0xff]
        %v499 = vld [vmem:[#allocation7 + $0x158] sm:$0xff]
        %v500 = vld [vmem:[#allocation7 + $0x160] sm:$0xff]
        %v501 = vld [vmem:[#allocation7 + $0x168] sm:$0xff]
        %v502 = vld [vmem:[#allocation7 + $0x170] sm:$0xff]
        %v503 = vld [vmem:[#allocation7 + $0x178] sm:$0xff]
        %v504 = vld [vmem:[#allocation7 + $0x180] sm:$0xff]
        %v505 = vld [vmem:[#allocation7 + $0x188] sm:$0xff]
        %v506 = vld [vmem:[#allocation7 + $0x190] sm:$0xff]
        %v507 = vld [vmem:[#allocation7 + $0x198] sm:$0xff]
        %v508 = vld [vmem:[#allocation7 + $0x1a0] sm:$0xff]
        %v509 = vld [vmem:[#allocation7 + $0x1a8] sm:$0xff]
        %v510 = vld [vmem:[#allocation7 + $0x1b0] sm:$0xff]
        %v511 = vld [vmem:[#allocation7 + $0x1b8] sm:$0xff]
        %v512 = vld [vmem:[#allocation7 + $0x1c0] sm:$0xff]
        %v513 = vld [vmem:[#allocation7 + $0x1c8] sm:$0xff]
        %v514 = vld [vmem:[#allocation7 + $0x1d0] sm:$0xff]
        %v515 = vld [vmem:[#allocation7 + $0x1d8] sm:$0xff]
        %v516 = vld [vmem:[#allocation7 + $0x1e0] sm:$0xff]
        %v517 = vld [vmem:[#allocation7 + $0x1e8] sm:$0xff]
        %v518 = vld [vmem:[#allocation7 + $0x1f0] sm:$0xff]
        %v519 = vld [vmem:[#allocation7 + $0x1f8] sm:$0xff]
        %v520 = vld [vmem:[%s4] sm:$0x3]
        %v522 = vlaneseq
        %v523 = vshrl.u32 %v522, 7
        %v524 = vsub.s32 0, %v523
        %v525 = vrot.slane %v520, %v524
        %v526 = vlaneseq
        %v527 = vshrl.u32 %v526, 7
        %v528 = vsub.s32 1, %v527
        %v529 = vrot.slane %v520, %v528
        %532 = vmatprep.subr.mxu0 %v487
        %533 = vmatpush1.msra.mxu0 %v486
        %534 = vmatprep.subr.mxu0 %v485
        %535 = vmatpush1.msra.mxu0 %v484
        %536 = vmatprep.subr.mxu0 %v483
        %537 = vmatpush1.msra.mxu0 %v482
        %538 = vmatprep.subr.mxu0 %v481
        %539 = vmatpush1.msra.mxu0 %v480
        %540 = vmatprep.subr.mxu0 %v479
        %541 = vmatpush1.msra.mxu0 %v478
        %542 = vmatprep.subr.mxu0 %v477
        %543 = vmatpush1.msra.mxu0 %v476
        %544 = vmatprep.subr.mxu0 %v475
        %545 = vmatpush1.msra.mxu0 %v474
        %546 = vmatprep.subr.mxu0 %v473
        %547 = vmatpush1.msra.mxu0 %v472
        %548 = vmatprep.subr.mxu0 %v471
        %549 = vmatpush1.msra.mxu0 %v470
        %550 = vmatprep.subr.mxu0 %v469
        %551 = vmatpush1.msra.mxu0 %v468
        %552 = vmatprep.subr.mxu0 %v467
        %553 = vmatpush1.msra.mxu0 %v466
        %554 = vmatprep.subr.mxu0 %v465
        %555 = vmatpush1.msra.mxu0 %v464
        %556 = vmatprep.subr.mxu0 %v463
        %557 = vmatpush1.msra.mxu0 %v462
        %558 = vmatprep.subr.mxu0 %v461
        %559 = vmatpush1.msra.mxu0 %v460
        %560 = vmatprep.subr.mxu0 %v459
        %561 = vmatpush1.msra.mxu0 %v458
        %562 = vmatprep.subr.mxu0 %v457
        %563 = vmatpush1.msra.mxu0 %v456
        %564 = vmatprep.subr.mxu0 %v519
        %565 = vmatpush2.msra.mxu0 %v518
        %566 = vmatprep.subr.mxu0 %v517
        %567 = vmatpush2.msra.mxu0 %v516
        %568 = vmatprep.subr.mxu0 %v515
        %569 = vmatpush2.msra.mxu0 %v514
        %570 = vmatprep.subr.mxu0 %v513
        %571 = vmatpush2.msra.mxu0 %v512
        %572 = vmatprep.subr.mxu0 %v511
        %573 = vmatpush2.msra.mxu0 %v510
        %574 = vmatprep.subr.mxu0 %v509
        %575 = vmatpush2.msra.mxu0 %v508
        %576 = vmatprep.subr.mxu0 %v507
        %577 = vmatpush2.msra.mxu0 %v506
        %578 = vmatprep.subr.mxu0 %v505
        %579 = vmatpush2.msra.mxu0 %v504
        %580 = vmatprep.subr.mxu0 %v503
        %581 = vmatpush2.msra.mxu0 %v502
        %582 = vmatprep.subr.mxu0 %v501
        %583 = vmatpush2.msra.mxu0 %v500
        %584 = vmatprep.subr.mxu0 %v499
        %585 = vmatpush2.msra.mxu0 %v498
        %586 = vmatprep.subr.mxu0 %v497
        %587 = vmatpush2.msra.mxu0 %v496
        %588 = vmatprep.subr.mxu0 %v495
        %589 = vmatpush2.msra.mxu0 %v494
        %590 = vmatprep.subr.mxu0 %v493
        %591 = vmatpush2.msra.mxu0 %v492
        %592 = vmatprep.subr.mxu0 %v491
        %593 = vmatpush2.msra.mxu0 %v490
        %594 = vmatprep.subr.mxu0 %v489
        %595 = vmatpush2.msra.mxu0 %v488
        %596 = vmatprep.mubr.f32.mxu0 %v455
        %597 = vmatmul.mubr.f32.gmra.mxu0 %v454
        %v598 = vpop.f32.mrf.mxu0
        %v599 = vadd.f32 %v525, %v598
        %v600 = vpop.f32.mrf.mxu0
        %v601 = vadd.f32 %v529, %v600
        %602 = vdwg.mxu0
        %v603 = vmax.f32 %v599, 0.0
        %v604 = vmax.f32 %v601, 0.0
        %v605 = vld [vmem:[#allocation8] sm:$0xff]
        %v606 = vld [vmem:[#allocation8 + $0x8] sm:$0xff]
        %v607 = vld [vmem:[#allocation8 + $0x10] sm:$0xff]
        %v608 = vld [vmem:[#allocation8 + $0x18] sm:$0xff]
        %v609 = vld [vmem:[#allocation8 + $0x20] sm:$0xff]
        %v610 = vld [vmem:[#allocation8 + $0x28] sm:$0xff]
        %v611 = vld [vmem:[#allocation8 + $0x30] sm:$0xff]
        %v612 = vld [vmem:[#allocation8 + $0x38] sm:$0xff]
        %v613 = vld [vmem:[#allocation8 + $0x40] sm:$0xff]
        %v614 = vld [vmem:[#allocation8 + $0x48] sm:$0xff]
        %v615 = vld [vmem:[#allocation8 + $0x50] sm:$0xff]
        %v616 = vld [vmem:[#allocation8 + $0x58] sm:$0xff]
        %v617 = vld [vmem:[#allocation8 + $0x60] sm:$0xff]
        %v618 = vld [vmem:[#allocation8 + $0x68] sm:$0xff]
        %v619 = vld [vmem:[#allocation8 + $0x70] sm:$0xff]
        %v620 = vld [vmem:[#allocation8 + $0x78] sm:$0xff]
        %v621 = vld [vmem:[#allocation8 + $0x80] sm:$0xff]
        %v622 = vld [vmem:[#allocation8 + $0x88] sm:$0xff]
        %v623 = vld [vmem:[#allocation8 + $0x90] sm:$0xff]
        %v624 = vld [vmem:[#allocation8 + $0x98] sm:$0xff]
        %v625 = vld [vmem:[#allocation8 + $0xa0] sm:$0xff]
        %v626 = vld [vmem:[#allocation8 + $0xa8] sm:$0xff]
        %v627 = vld [vmem:[#allocation8 + $0xb0] sm:$0xff]
        %v628 = vld [vmem:[#allocation8 + $0xb8] sm:$0xff]
        %v629 = vld [vmem:[#allocation8 + $0xc0] sm:$0xff]
        %v630 = vld [vmem:[#allocation8 + $0xc8] sm:$0xff]
        %v631 = vld [vmem:[#allocation8 + $0xd0] sm:$0xff]
        %v632 = vld [vmem:[#allocation8 + $0xd8] sm:$0xff]
        %v633 = vld [vmem:[#allocation8 + $0xe0] sm:$0xff]
        %v634 = vld [vmem:[#allocation8 + $0xe8] sm:$0xff]
        %v635 = vld [vmem:[#allocation8 + $0xf0] sm:$0xff]
        %v636 = vld [vmem:[#allocation8 + $0xf8] sm:$0xff]
        %v637 = vld [vmem:[#allocation8 + $0x100] sm:$0xff]
        %v638 = vld [vmem:[#allocation8 + $0x108] sm:$0xff]
        %v639 = vld [vmem:[#allocation8 + $0x110] sm:$0xff]
        %v640 = vld [vmem:[#allocation8 + $0x118] sm:$0xff]
        %v641 = vld [vmem:[#allocation8 + $0x120] sm:$0xff]
        %v642 = vld [vmem:[#allocation8 + $0x128] sm:$0xff]
        %v643 = vld [vmem:[#allocation8 + $0x130] sm:$0xff]
        %v644 = vld [vmem:[#allocation8 + $0x138] sm:$0xff]
        %v645 = vld [vmem:[#allocation8 + $0x140] sm:$0xff]
        %v646 = vld [vmem:[#allocation8 + $0x148] sm:$0xff]
        %v647 = vld [vmem:[#allocation8 + $0x150] sm:$0xff]
        %v648 = vld [vmem:[#allocation8 + $0x158] sm:$0xff]
        %v649 = vld [vmem:[#allocation8 + $0x160] sm:$0xff]
        %v650 = vld [vmem:[#allocation8 + $0x168] sm:$0xff]
        %v651 = vld [vmem:[#allocation8 + $0x170] sm:$0xff]
        %v652 = vld [vmem:[#allocation8 + $0x178] sm:$0xff]
        %v653 = vld [vmem:[#allocation8 + $0x180] sm:$0xff]
        %v654 = vld [vmem:[#allocation8 + $0x188] sm:$0xff]
        %v655 = vld [vmem:[#allocation8 + $0x190] sm:$0xff]
        %v656 = vld [vmem:[#allocation8 + $0x198] sm:$0xff]
        %v657 = vld [vmem:[#allocation8 + $0x1a0] sm:$0xff]
        %v658 = vld [vmem:[#allocation8 + $0x1a8] sm:$0xff]
        %v659 = vld [vmem:[#allocation8 + $0x1b0] sm:$0xff]
        %v660 = vld [vmem:[#allocation8 + $0x1b8] sm:$0xff]
        %v661 = vld [vmem:[#allocation8 + $0x1c0] sm:$0xff]
        %v662 = vld [vmem:[#allocation8 + $0x1c8] sm:$0xff]
        %v663 = vld [vmem:[#allocation8 + $0x1d0] sm:$0xff]
        %v664 = vld [vmem:[#allocation8 + $0x1d8] sm:$0xff]
        %v665 = vld [vmem:[#allocation8 + $0x1e0] sm:$0xff]
        %v666 = vld [vmem:[#allocation8 + $0x1e8] sm:$0xff]
        %v667 = vld [vmem:[#allocation8 + $0x1f0] sm:$0xff]
        %v668 = vld [vmem:[#allocation8 + $0x1f8] sm:$0xff]
        %v669 = vld [vmem:[%s6] sm:$0x3]
        %v671 = vlaneseq
        %v672 = vshrl.u32 %v671, 7
        %v673 = vsub.s32 0, %v672
        %v674 = vrot.slane %v669, %v673
        %v675 = vlaneseq
        %v676 = vshrl.u32 %v675, 7
        %v677 = vsub.s32 1, %v676
        %v678 = vrot.slane %v669, %v677
        %681 = vmatprep.subr.mxu0 %v636
        %682 = vmatpush1.msra.mxu0 %v635
        %683 = vmatprep.subr.mxu0 %v634
        %684 = vmatpush1.msra.mxu0 %v633
        %685 = vmatprep.subr.mxu0 %v632
        %686 = vmatpush1.msra.mxu0 %v631
        %687 = vmatprep.subr.mxu0 %v630
        %688 = vmatpush1.msra.mxu0 %v629
        %689 = vmatprep.subr.mxu0 %v628
        %690 = vmatpush1.msra.mxu0 %v627
        %691 = vmatprep.subr.mxu0 %v626
        %692 = vmatpush1.msra.mxu0 %v625
        %693 = vmatprep.subr.mxu0 %v624
        %694 = vmatpush1.msra.mxu0 %v623
        %695 = vmatprep.subr.mxu0 %v622
        %696 = vmatpush1.msra.mxu0 %v621
        %697 = vmatprep.subr.mxu0 %v620
        %698 = vmatpush1.msra.mxu0 %v619
        %699 = vmatprep.subr.mxu0 %v618
        %700 = vmatpush1.msra.mxu0 %v617
        %701 = vmatprep.subr.mxu0 %v616
        %702 = vmatpush1.msra.mxu0 %v615
        %703 = vmatprep.subr.mxu0 %v614
        %704 = vmatpush1.msra.mxu0 %v613
        %705 = vmatprep.subr.mxu0 %v612
        %706 = vmatpush1.msra.mxu0 %v611
        %707 = vmatprep.subr.mxu0 %v610
        %708 = vmatpush1.msra.mxu0 %v609
        %709 = vmatprep.subr.mxu0 %v608
        %710 = vmatpush1.msra.mxu0 %v607
        %711 = vmatprep.subr.mxu0 %v606
        %712 = vmatpush1.msra.mxu0 %v605
        %713 = vmatprep.subr.mxu0 %v668
        %714 = vmatpush2.msra.mxu0 %v667
        %715 = vmatprep.subr.mxu0 %v666
        %716 = vmatpush2.msra.mxu0 %v665
        %717 = vmatprep.subr.mxu0 %v664
        %718 = vmatpush2.msra.mxu0 %v663
        %719 = vmatprep.subr.mxu0 %v662
        %720 = vmatpush2.msra.mxu0 %v661
        %721 = vmatprep.subr.mxu0 %v660
        %722 = vmatpush2.msra.mxu0 %v659
        %723 = vmatprep.subr.mxu0 %v658
        %724 = vmatpush2.msra.mxu0 %v657
        %725 = vmatprep.subr.mxu0 %v656
        %726 = vmatpush2.msra.mxu0 %v655
        %727 = vmatprep.subr.mxu0 %v654
        %728 = vmatpush2.msra.mxu0 %v653
        %729 = vmatprep.subr.mxu0 %v652
        %730 = vmatpush2.msra.mxu0 %v651
        %731 = vmatprep.subr.mxu0 %v650
        %732 = vmatpush2.msra.mxu0 %v649
        %733 = vmatprep.subr.mxu0 %v648
        %734 = vmatpush2.msra.mxu0 %v647
        %735 = vmatprep.subr.mxu0 %v646
        %736 = vmatpush2.msra.mxu0 %v645
        %737 = vmatprep.subr.mxu0 %v644
        %738 = vmatpush2.msra.mxu0 %v643
        %739 = vmatprep.subr.mxu0 %v642
        %740 = vmatpush2.msra.mxu0 %v641
        %741 = vmatprep.subr.mxu0 %v640
        %742 = vmatpush2.msra.mxu0 %v639
        %743 = vmatprep.subr.mxu0 %v638
        %744 = vmatpush2.msra.mxu0 %v637
        %745 = vmatprep.mubr.f32.mxu0 %v604
        %746 = vmatmul.mubr.f32.gmra.mxu0 %v603
        %v747 = vpop.f32.mrf.mxu0
        %v748 = vadd.f32 %v674, %v747
        %v749 = vpop.f32.mrf.mxu0
        %v750 = vadd.f32 %v678, %v749
        %751 = vdwg.mxu0
        %v752 = vmul.f32 %v748, %v748
        %v753 = vmul.f32 %v750, %v750
        %v754 = vadd.f32 %v752, %v753
        %755 = vadd.xlane.f32.xlu0 %v754
        %v756 = vpop.xlane.xlu0 %755
        %v757 = vrsqrt.pop %v756
        %v758 = vmul.f32 %v748, %v757
        %v759 = vmul.f32 %v750, %v757
        %760 = vst [vmem:[%s337] sm:$0xff] %v758
        %761 = vst [vmem:[%s337 + $0x8] sm:$0xff] %v759
        %s762 = sand.u32 %s186, 1
        %s763 = scalar_lea.sflag [#allocation4], %s762
        %s764 = sand.u32 %s186, 1
        %s765 = smul.addr %s764, 16
        %s766 = scalar_lea.vmem [#allocation10], %s765
        // Predicated region
        $region65: #{text_ffn_align_forward.1} parent=47 // pred_check
          %p767 = pneg %p196
        $region66: #{text_ffn_align_forward.1} parent=47 // pred_check_branch
          %769 = sbr.rel (%p767) target = $region68
        $region67: #{text_ffn_align_forward.1} parent=47 // pred_region
          %s771 = ssub.s32 256, 256
          %772 = vsyncadd %s763, %s771
          %s773 = smul.addr %s26, 2
          %s774 = smul.addr %s773, 128
          %s775 = scalar_lea.hbm %s7, %s774
          %s777 = sshll.u32 %s766, 4
          %s778 = int_to_ptr.vmem [resolvable:$true] %s777
          %780 = dma.vmem_to_hbm [thread:$0]  %s778, 256, %s775, %s763
        $region68: #{text_ffn_align_forward.1} parent=47 // pred_fallthru
          _
      $region48: #{text_ffn_align_forward.1} parent=5 // pred_fallthru
        _
      %p781 = scmp.le.s32.totalorder 2, %s21
      // Predicated region
      $region69: #{text_ffn_align_forward.1} parent=5 // pred_check
        %p782 = pneg %p781
      $region70: #{text_ffn_align_forward.1} parent=5 // pred_check_branch
        %784 = sbr.rel (%p782) target = $region72
      $region71: #{text_ffn_align_forward.1} parent=5 // pred_region
        %s785 = ssub.s32 %s21, 2
        // Predicated region
        $region73: #{text_ffn_align_forward.1} parent=71 // pred_check
          %p786 = pneg %p202
        $region74: #{text_ffn_align_forward.1} parent=71 // pred_check_branch
          %788 = sbr.rel (%p786) target = $region76
        $region75: #{text_ffn_align_forward.1} parent=71 // pred_region
          %s789 = sand.u32 %s187, 1
          %s790 = scalar_lea.sflag [#allocation4], %s789
          %s791 = sand.u32 %s187, 1
          %s792 = smul.addr %s791, 16
          %s793 = scalar_lea.vmem [#allocation10], %s792
          %794 = dma.done %s790, 256
        $region76: #{text_ffn_align_forward.1} parent=71 // pred_fallthru
          _
      $region72: #{text_ffn_align_forward.1} parent=5 // pred_fallthru
        _
    $region6: #{text_ffn_align_forward.1} parent=1 // loop_footer
      %s25 = sadd.s32 1, %s21
    $region7: #{text_ffn_align_forward.1} parent=1 // loop_footer_branch
      %20 = sbr.rel target = $region3
    $region8: #{text_ffn_align_forward.1} parent=1 // loop_exit
      _
    %795 = vsyncpa [#allocation3], 1
    %s796 = scalar_lea.sflag [#allocation3], 1
    %797 = vsyncpa %s796, 1
    %798 = vsyncpa [#allocation6], 1
    %799 = vsyncpa [#allocation9], 1
    %800 = vsyncpa [#allocation4], 1
    %s801 = scalar_lea.sflag [#allocation4], 1
    %802 = vsyncpa %s801, 1

</llo_original>
